<compile_context>
chip_gen: v7x
topology: tpu7x:2x2x1
jax: 0.10.0
libtpu: 0.0.40
codegen_flags: <defaults>
</compile_context>

<pallas_src>
import functools

import jax
import jax.numpy as jnp
from jax.experimental import pallas as pl
from jax.experimental.pallas import tpu as pltpu

CLAMP_EXP = 15
_LN_EPS = 1e-5
_VMEM_LIMIT = 48 * 1024 * 1024   # conservative: fits v7x (64 MiB physical)


def _tile(dim, target, unit):
    """Largest tile <= target that is a multiple of `unit` and divides `dim`.
    Falls back to the full dimension (always legal per Mosaic's (8,128) rule)."""
    if dim <= target:
        return dim
    t = (target // unit) * unit
    while t >= unit:
        if dim % t == 0:
            return t
        t -= unit
    return dim


# ----------------------------------------------------------------------------
# Fused (LayerNorm +) Linear kernels
# ----------------------------------------------------------------------------
def _ln_linear_kernel(x_ref, g_ref, bt_ref, w_ref, b_ref, o_ref, *, relu):
    x = x_ref[...].astype(jnp.float32)                          # (tm, K)
    mu = jnp.mean(x, axis=-1, keepdims=True)
    xc = x - mu
    var = jnp.mean(xc * xc, axis=-1, keepdims=True)
    xn = xc * jax.lax.rsqrt(var + _LN_EPS)
    xn = xn * g_ref[...] + bt_ref[...]
    y = jnp.dot(xn.astype(jnp.bfloat16), w_ref[...],
                preferred_element_type=jnp.float32)             # (tm, tn)
    y = y + b_ref[...]
    if relu:
        y = jnp.maximum(y, 0.0)
    o_ref[...] = y.astype(o_ref.dtype)


def _linear_kernel(x_ref, w_ref, b_ref, o_ref, acc_ref, *, relu):
    k = pl.program_id(2)

    @pl.when(k == 0)
    def _():
        acc_ref[...] = jnp.zeros_like(acc_ref)

    acc_ref[...] += jnp.dot(x_ref[...].astype(jnp.bfloat16), w_ref[...],
                            preferred_element_type=jnp.float32)

    @pl.when(k == pl.num_programs(2) - 1)
    def _():
        y = acc_ref[...] + b_ref[...]
        if relu:
            y = jnp.maximum(y, 0.0)
        o_ref[...] = y.astype(o_ref.dtype)


def fused_linear(x, w, b, *, gamma=None, beta=None, relu=False,
                 out_dtype=jnp.float32, tm=256, tn=256, tk=512):
    """y = [LayerNorm](x) @ w + b.  Weights stored pre-transposed as (K, N)
    (lane-dense RHS), bf16 operands, f32 accumulation on the MXU."""
    M, K = x.shape
    _, N = w.shape
    tm = _tile(M, tm, 8)
    tn = _tile(N, tn, 128)
    b2 = b.reshape(1, N).astype(jnp.float32)

    if gamma is not None:
        # LayerNorm needs the whole feature dim resident: no K tiling.
        return pl.pallas_call(
            functools.partial(_ln_linear_kernel, relu=relu),
            out_shape=jax.ShapeDtypeStruct((M, N), out_dtype),
            grid=(M // tm, N // tn),
            in_specs=[pl.BlockSpec((tm, K), lambda i, j: (i, 0)),
                      pl.BlockSpec((1, K), lambda i, j: (0, 0)),
                      pl.BlockSpec((1, K), lambda i, j: (0, 0)),
                      pl.BlockSpec((K, tn), lambda i, j: (0, j)),
                      pl.BlockSpec((1, tn), lambda i, j: (0, j))],
            out_specs=pl.BlockSpec((tm, tn), lambda i, j: (i, j)),
            compiler_params=pltpu.CompilerParams(
                dimension_semantics=("parallel", "parallel"),
                vmem_limit_bytes=_VMEM_LIMIT),
        )(x, gamma.reshape(1, K).astype(jnp.float32),
          beta.reshape(1, K).astype(jnp.float32), w, b2)

    tk = _tile(K, tk, 128)
    return pl.pallas_call(
        functools.partial(_linear_kernel, relu=relu),
        out_shape=jax.ShapeDtypeStruct((M, N), out_dtype),
        grid=(M // tm, N // tn, K // tk),
        in_specs=[pl.BlockSpec((tm, tk), lambda i, j, k: (i, k)),
                  pl.BlockSpec((tk, tn), lambda i, j, k: (k, j)),
                  pl.BlockSpec((1, tn), lambda i, j, k: (0, j))],
        out_specs=pl.BlockSpec((tm, tn), lambda i, j, k: (i, j)),
        scratch_shapes=[pltpu.VMEM((tm, tn), jnp.float32)],
        compiler_params=pltpu.CompilerParams(
            dimension_semantics=("parallel", "parallel", "arbitrary"),
            vmem_limit_bytes=_VMEM_LIMIT),
    )(x, w, b2)


# ----------------------------------------------------------------------------
# Relative multi-head attention kernel (head groups per grid step)
# ----------------------------------------------------------------------------
def _rel_attn_kernel(q_ref, k_ref, v_ref, u_ref, bd_ref, o_ref, *, mem_len, scale):
    q = q_ref[0].astype(jnp.float32)                 # (Hp, S, Dh)
    k = k_ref[0]                                     # (Hp, T, Dh) bf16
    v = v_ref[0]                                     # (Hp, T, Dh) bf16
    u = u_ref[...].astype(jnp.float32)               # (Hp, 1, Dh)
    bd = bd_ref[0].astype(jnp.float32)               # (Hp, S, T)

    _, S, _ = q.shape
    T = k.shape[1]

    qc = (q + u).astype(jnp.bfloat16)
    ac = jnp.einsum('hsd,htd->hst', qc, k,
                    preferred_element_type=jnp.float32)          # content term
    score = (ac + bd) * scale

    row = jax.lax.broadcasted_iota(jnp.int32, (S, T), 0)
    col = jax.lax.broadcasted_iota(jnp.int32, (S, T), 1)
    mask = (col <= row + mem_len)[None, :, :]        # causal incl. memory
    score = jnp.where(mask, score, -1e30)

    m = jnp.max(score, axis=-1, keepdims=True)
    p = jnp.exp(score - m)
    p = p * pl.reciprocal(jnp.sum(p, axis=-1, keepdims=True), approx=True)

    out = jnp.einsum('hst,htd->hsd', p.astype(jnp.bfloat16), v,
                     preferred_element_type=jnp.float32)
    o_ref[0] = out.astype(o_ref.dtype)


def _head_group(H, S, T, D, budget=2 * 1024 * 1024):
    per_head = 2 * (2 * S * D + 2 * T * D + S * T)   # bf16 q,k,v,out,bd per head
    for hp in range(H, 0, -1):
        if H % hp == 0 and hp * per_head <= budget:
            return hp
    return 1


def rel_multihead_attention(q, k, v, u_bias, bd, mem_len):
    """q: (B,H,S,Dh), k/v: (B,H,T,Dh), bd: (B,H,S,T) relative-position logits."""
    B, H, S, D = q.shape
    T = k.shape[2]
    scale = 1.0 / (D ** 0.5)
    hp = _head_group(H, S, T, D)
    return pl.pallas_call(
        functools.partial(_rel_attn_kernel, mem_len=mem_len, scale=scale),
        out_shape=jax.ShapeDtypeStruct((B, H, S, D), jnp.bfloat16),
        grid=(H // hp, B),   # batch innermost: head-indexed blocks stay resident
        in_specs=[
            pl.BlockSpec((1, hp, S, D), lambda g, b: (b, g, 0, 0)),
            pl.BlockSpec((1, hp, T, D), lambda g, b: (b, g, 0, 0)),
            pl.BlockSpec((1, hp, T, D), lambda g, b: (b, g, 0, 0)),
            pl.BlockSpec((hp, 1, D), lambda g, b: (g, 0, 0)),
            pl.BlockSpec((1, hp, S, T), lambda g, b: (b, g, 0, 0)),
        ],
        out_specs=pl.BlockSpec((1, hp, S, D), lambda g, b: (b, g, 0, 0)),
        compiler_params=pltpu.CompilerParams(
            dimension_semantics=("parallel", "parallel"),
            vmem_limit_bytes=_VMEM_LIMIT),
    )(q, k, v, u_bias.reshape(H, 1, D), bd)


# ----------------------------------------------------------------------------
# LM head: fused final LayerNorm + tied decoding, vocab-streamed softmax/argmax
# ----------------------------------------------------------------------------
def _logits_kernel(h_ref, g_ref, bt_ref, w_ref,
                   logit_ref, pred_ref, m_ref, l_ref,
                   xn_sc, m_sc, l_sc, av_sc, ai_sc, *, nv, tv):
    j = pl.program_id(1)

    @pl.when(j == 0)
    def _():
        x = h_ref[...].astype(jnp.float32)
        mu = jnp.mean(x, axis=-1, keepdims=True)
        xc = x - mu
        var = jnp.mean(xc * xc, axis=-1, keepdims=True)
        xn = (xc * jax.lax.rsqrt(var + _LN_EPS)) * g_ref[...] + bt_ref[...]
        xn_sc[...] = xn.astype(jnp.bfloat16)
        m_sc[...] = jnp.full_like(m_sc, -jnp.inf)
        l_sc[...] = jnp.zeros_like(l_sc)
        av_sc[...] = jnp.full_like(av_sc, -jnp.inf)
        ai_sc[...] = jnp.zeros_like(ai_sc)

    logits = jnp.dot(xn_sc[...], w_ref[...], preferred_element_type=jnp.float32)
    logits = jnp.clip(logits, -float(CLAMP_EXP), float(CLAMP_EXP))
    logit_ref[...] = logits

    # online softmax statistics
    tile_max = jnp.max(logits, axis=-1, keepdims=True)
    new_m = jnp.maximum(m_sc[...], tile_max)
    l_sc[...] = (l_sc[...] * jnp.exp(m_sc[...] - new_m) +
                 jnp.sum(jnp.exp(logits - new_m), axis=-1, keepdims=True))
    m_sc[...] = new_m

    # streaming argmax (first maximal index)
    col = jax.lax.broadcasted_iota(jnp.int32, logits.shape, 1) + j * tv
    cand = jnp.where(logits == tile_max, col, jnp.int32(2147483647))
    tile_idx = jnp.min(cand, axis=-1, keepdims=True)
    better = tile_max > av_sc[...]
    av_sc[...] = jnp.where(better, tile_max, av_sc[...])
    ai_sc[...] = jnp.where(better, tile_idx, ai_sc[...])

    @pl.when(j == nv - 1)
    def _():
        pred_ref[...] = ai_sc[...]
        m_ref[...] = m_sc[...]
        l_ref[...] = l_sc[...]


def _softmax_kernel(logit_ref, m_ref, l_ref, prob_ref):
    prob_ref[...] = jnp.exp(logit_ref[...] - m_ref[...]) / l_ref[...]


def lm_head(h, gamma, beta, w_dec):
    """final LayerNorm + tied word decoding + clamp + softmax + argmax."""
    M, E = h.shape
    V = w_dec.shape[1]
    tm = _tile(M, 256, 8)
    tv = _tile(V, 512, 128)
    nm, nv = M // tm, V // tv

    logits, pred, mmax, lsum = pl.pallas_call(
        functools.partial(_logits_kernel, nv=nv, tv=tv),
        out_shape=(jax.ShapeDtypeStruct((M, V), jnp.float32),
                   jax.ShapeDtypeStruct((M, 1), jnp.int32),
                   jax.ShapeDtypeStruct((M, 1), jnp.float32),
                   jax.ShapeDtypeStruct((M, 1), jnp.float32)),
        grid=(nm, nv),
        in_specs=[pl.BlockSpec((tm, E), lambda i, j: (i, 0)),
                  pl.BlockSpec((1, E), lambda i, j: (0, 0)),
                  pl.BlockSpec((1, E), lambda i, j: (0, 0)),
                  pl.BlockSpec((E, tv), lambda i, j: (0, j))],
        out_specs=(pl.BlockSpec((tm, tv), lambda i, j: (i, j)),
                   pl.BlockSpec((tm, 1), lambda i, j: (i, 0)),
                   pl.BlockSpec((tm, 1), lambda i, j: (i, 0)),
                   pl.BlockSpec((tm, 1), lambda i, j: (i, 0))),
        scratch_shapes=[pltpu.VMEM((tm, E), jnp.bfloat16),
                        pltpu.VMEM((tm, 1), jnp.float32),
                        pltpu.VMEM((tm, 1), jnp.float32),
                        pltpu.VMEM((tm, 1), jnp.float32),
                        pltpu.VMEM((tm, 1), jnp.int32)],
        compiler_params=pltpu.CompilerParams(
            dimension_semantics=("parallel", "arbitrary"),
            vmem_limit_bytes=_VMEM_LIMIT),
    )(h, gamma.reshape(1, E).astype(jnp.float32),
      beta.reshape(1, E).astype(jnp.float32), w_dec)

    prob = pl.pallas_call(
        _softmax_kernel,
        out_shape=jax.ShapeDtypeStruct((M, V), jnp.float32),
        grid=(nm, nv),
        in_specs=[pl.BlockSpec((tm, tv), lambda i, j: (i, j)),
                  pl.BlockSpec((tm, 1), lambda i, j: (i, 0)),
                  pl.BlockSpec((tm, 1), lambda i, j: (i, 0))],
        out_specs=pl.BlockSpec((tm, tv), lambda i, j: (i, j)),
        compiler_params=pltpu.CompilerParams(
            dimension_semantics=("parallel", "parallel"),
            vmem_limit_bytes=_VMEM_LIMIT),
    )(logits, mmax, lsum)
    return logits, prob, pred


# ----------------------------------------------------------------------------
# Model glue (parameter setup, reshapes, residuals)
# ----------------------------------------------------------------------------
def sinusoid_table(n_pos, dim):
    pos = jnp.arange(n_pos, dtype=jnp.float32)
    inv_freq = 1.0 / (10000.0 ** (jnp.arange(0, dim, 2, dtype=jnp.float32) / dim))
    ang = pos[:, None] * inv_freq[None, :]
    return jnp.concatenate([jnp.sin(ang), jnp.cos(ang)], axis=-1)   # (n_pos, dim)


def _rel_shift(x):
    """Canonical Transformer-XL relative shift on (B, H, S, T) logits
    (columns ordered by descending relative distance)."""
    B, H, S, T = x.shape
    x = jnp.pad(x, ((0, 0), (0, 0), (0, 0), (1, 0)))
    x = x.reshape(B, H, T + 1, S)[:, :, 1:, :]
    return x.reshape(B, H, S, T)


def init_params(key, *, n_layer, n_embedding, n_state_ffn, n_head, n_context,
                vocab_size, n_positional_embedding, initializer_range=0.02):
    Dh = n_embedding // n_head
    keys = iter(jax.random.split(key, 4 + 8 * n_layer))

    def normal(shape, dtype=jnp.float32):
        return (initializer_range *
                jax.random.normal(next(keys), shape, dtype=jnp.float32)).astype(dtype)

    E = n_embedding
    bf16 = jnp.bfloat16
    params = {
        'word_embedding': normal((vocab_size, E)),   # tied with word_decoding
        'ln_f_g': jnp.ones((E,), jnp.float32),
        'ln_f_b': jnp.zeros((E,), jnp.float32),
        'rel_sinusoid': sinusoid_table(n_positional_embedding, E),
        'layers': [],
        'config': dict(n_embedding=E, n_head=n_head,
                       n_positional_embedding=n_positional_embedding,
                       n_context=n_context),
    }
    for _ in range(n_layer):
        # matmul weights stored pre-transposed (K, N) and in bf16
        params['layers'].append(dict(
            ln1_g=jnp.ones((E,), jnp.float32), ln1_b=jnp.zeros((E,), jnp.float32),
            w_qkv=normal((E, 3 * E), bf16), b_qkv=jnp.zeros((3 * E,), jnp.float32),
            w_r=normal((E, E), bf16),
            u_bias=normal((n_head, Dh)), v_bias=normal((n_head, Dh)),
            w_o=normal((E, E), bf16), b_o=jnp.zeros((E,), jnp.float32),
            ln2_g=jnp.ones((E,), jnp.float32), ln2_b=jnp.zeros((E,), jnp.float32),
            w_ff1=normal((E, n_state_ffn), bf16),
            b_ff1=jnp.zeros((n_state_ffn,), jnp.float32),
            w_ff2=normal((n_state_ffn, E), bf16),
            b_ff2=jnp.zeros((E,), jnp.float32),
        ))
    return params


def decoder_layer(h, lp, mem, n_head, r_rows, max_cache_length):
    B, S, E = h.shape
    Dh = E // n_head
    bf16 = jnp.bfloat16
    x2 = h.reshape(B * S, E)

    # pre-LN fused into the QKV projection
    qkv = fused_linear(x2, lp['w_qkv'], lp['b_qkv'],
                       gamma=lp['ln1_g'], beta=lp['ln1_b'])            # (B*S, 3E)
    q, k_cur, v_cur = jnp.split(qkv, 3, axis=-1)

    def to_heads(t):  # TODO(synk): head split/transpose kept as thin XLA glue.
        return t.reshape(B, S, n_head, Dh).transpose(0, 2, 1, 3)

    q, k_cur, v_cur = to_heads(q), to_heads(k_cur), to_heads(v_cur)
    if mem is not None:
        k = jnp.concatenate([mem[0], k_cur], axis=2)
        v = jnp.concatenate([mem[1], v_cur], axis=2)
    else:
        k, v = k_cur, v_cur
    T = k.shape[2]
    mem_len = T - S

    # positional term: project sinusoid rows (Pallas matmul), then
    # (q + v_bias) @ r^T and the canonical rel-shift (no (H,S,T,Dh) tensor).
    r_proj = fused_linear(r_rows, lp['w_r'],
                          jnp.zeros((E,), jnp.float32))                 # (T, E)
    r_heads = r_proj.reshape(T, n_head, Dh).transpose(1, 0, 2)          # (H,T,Dh)
    qv = q + lp['v_bias'][None, :, None, :]                             # (B,H,S,Dh)
    bd = _rel_shift(jnp.einsum('bhsd,htd->bhst', qv, r_heads))          # (B,H,S,T)

    attn = rel_multihead_attention(q.astype(bf16), k.astype(bf16),
                                   v.astype(bf16), lp['u_bias'],
                                   bd.astype(bf16), mem_len)            # bf16
    attn = attn.transpose(0, 2, 1, 3).reshape(B * S, E)
    attn = fused_linear(attn, lp['w_o'], lp['b_o'])                     # (B*S, E)
    h = h + attn.reshape(B, S, E)        # residual (dropout_residual = identity)

    # pre-LN fused into the first FFN projection
    ff = fused_linear(h.reshape(B * S, E), lp['w_ff1'], lp['b_ff1'],
                      gamma=lp['ln2_g'], beta=lp['ln2_b'], relu=True,
                      out_dtype=jnp.bfloat16)
    ff = fused_linear(ff, lp['w_ff2'], lp['b_ff2'])
    h = h + ff.reshape(B, S, E)

    if max_cache_length is not None:
        k_cache, v_cache = k[:, :, -max_cache_length:], v[:, :, -max_cache_length:]
    else:
        k_cache, v_cache = k, v
    return h, (k_cache, v_cache)


def transformer_xl_forward(params, x, cached_key_value=None, max_cache_length=None):
    cfg = params['config']
    E, H = cfg['n_embedding'], cfg['n_head']
    n_pos = cfg['n_positional_embedding']
    B, S = x.shape

    h = params['word_embedding'][x]                  # embedding lookup (glue)
    # dropout_embedding / dropout_attention / dropout_residual: identity (eval)

    mem_len = 0 if cached_key_value is None else cached_key_value[0][0].shape[2]
    T = S + mem_len
    # sinusoid rows in descending relative-distance order (canonical TXL),
    # clamped to the table; layer-invariant so hoisted out of the layer loop.
    d_desc = jnp.clip(jnp.arange(T - 1, -1, -1), 0, n_pos - 1)
    r_rows = params['rel_sinusoid'][d_desc]          # (T, E)

    new_cache = []
    for li, lp in enumerate(params['layers']):
        mem = None if cached_key_value is None else cached_key_value[li]
        h, kv = decoder_layer(h, lp, mem, H, r_rows, max_cache_length)
        new_cache.append(kv)

    w_dec = params['word_embedding'].T.astype(jnp.bfloat16)   # tied decoding (E,V)
    out2d, prob2d, pred2d = lm_head(h.reshape(B * S, E),
                                    params['ln_f_g'], params['ln_f_b'], w_dec)
    V = params['word_embedding'].shape[0]
    output = out2d.reshape(B, S, V)
    prob = prob2d.reshape(B, S, V)
    pred = pred2d.reshape(B, S)                      # int32 (torch uses int64)
    return (output, prob, pred), tuple(new_cache)


# ----------------------------------------------------------------------------
if __name__ == "__main__":
    key = jax.random.PRNGKey(0)
    pkey, xkey, xkey2 = jax.random.split(key, 3)

    n_layer, n_embedding, n_state_ffn, n_head = 2, 32, 64, 4
    n_context, vocab_size, n_pos = 8, 64, 32
    batch, seq = 2, 8

    params = init_params(pkey, n_layer=n_layer, n_embedding=n_embedding,
                         n_state_ffn=n_state_ffn, n_head=n_head,
                         n_context=n_context, vocab_size=vocab_size,
                         n_positional_embedding=n_pos)

    x = jax.random.randint(xkey, (batch, seq), 0, vocab_size, dtype=jnp.int32)

    # first call, no cache
    (output, prob, pred), cache = transformer_xl_forward(
        params, x, cached_key_value=None, max_cache_length=n_context)
    # second call re-uses the key/value cache (Transformer-XL memory path)
    x2 = jax.random.randint(xkey2, (batch, seq), 0, vocab_size, dtype=jnp.int32)
    (output2, prob2, pred2), cache2 = transformer_xl_forward(
        params, x2, cached_key_value=cache, max_cache_length=n_context)

    jax.block_until_ready((output, prob, pred, output2, prob2, pred2, cache2))

    assert output.shape == (batch, seq, vocab_size)
    assert prob.shape == (batch, seq, vocab_size)
    assert pred.shape == (batch, seq)
    assert output2.shape == (batch, seq, vocab_size)
    print("KERNEL_OK")
</pallas_src>

<mosaic_0001>
module attributes {stable_mosaic.version = 11 : i64} {
  func.func @_ln_linear_kernel(%arg0: i32, %arg1: i32, %arg2: memref<16x32xf32, #tpu.memory_space<vmem>>, %arg3: memref<1x32xf32, #tpu.memory_space<vmem>>, %arg4: memref<1x32xf32, #tpu.memory_space<vmem>>, %arg5: memref<32x96xbf16, #tpu.memory_space<vmem>>, %arg6: memref<1x96xf32, #tpu.memory_space<vmem>>, %arg7: memref<16x96xf32, #tpu.memory_space<vmem>>) attributes {dimension_semantics = [#tpu.dimension_semantics<parallel>, #tpu.dimension_semantics<parallel>], iteration_bounds = array<i64: 1, 1>, scalar_prefetch = 0 : i64, scratch_operands = 0 : i64, tpu.core_type = #tpu.core_type<tc>, window_params = [{transform_indices = @transform_0, window_bounds = array<i64: 16, 32>}, {pipeline_mode = #tpu.pipeline_mode<synchronous>, transform_indices = @transform_1, window_bounds = array<i64: 1, 32>}, {pipeline_mode = #tpu.pipeline_mode<synchronous>, transform_indices = @transform_2, window_bounds = array<i64: 1, 32>}, {transform_indices = @transform_3, window_bounds = array<i64: 32, 96>}, {transform_indices = @transform_4, window_bounds = array<i64: 1, 96>}, {transform_indices = @transform_5, window_bounds = array<i64: 16, 96>}]} {
    %c0 = arith.constant 0 : index
    %c0_0 = arith.constant 0 : index
    %0 = vector.load %arg2[%c0, %c0_0] : memref<16x32xf32, #tpu.memory_space<vmem>>, vector<16x32xf32>
    %cst = arith.constant dense<0.000000e+00> : vector<16xf32>
    %1 = vector.multi_reduction <add>, %0, %cst [1] : vector<16x32xf32> to vector<16xf32>
    %2 = vector.shape_cast %1 : vector<16xf32> to vector<16x1xf32>
    %cst_1 = arith.constant 3.200000e+01 : f32
    %3 = vector.broadcast %cst_1 : f32 to vector<16x1xf32>
    %4 = arith.divf %2, %3 : vector<16x1xf32>
    %5 = vector.broadcast %4 : vector<16x1xf32> to vector<16x32xf32>
    %6 = arith.subf %0, %5 : vector<16x32xf32>
    %7 = arith.mulf %6, %6 : vector<16x32xf32>
    %cst_2 = arith.constant dense<0.000000e+00> : vector<16xf32>
    %8 = vector.multi_reduction <add>, %7, %cst_2 [1] : vector<16x32xf32> to vector<16xf32>
    %9 = vector.shape_cast %8 : vector<16xf32> to vector<16x1xf32>
    %cst_3 = arith.constant 3.200000e+01 : f32
    %10 = vector.broadcast %cst_3 : f32 to vector<16x1xf32>
    %11 = arith.divf %9, %10 : vector<16x1xf32>
    %cst_4 = arith.constant 9.99999974E-6 : f32
    %12 = vector.broadcast %cst_4 : f32 to vector<16x1xf32>
    %13 = arith.addf %11, %12 : vector<16x1xf32>
    %14 = math.rsqrt %13 : vector<16x1xf32>
    %15 = vector.broadcast %14 : vector<16x1xf32> to vector<16x32xf32>
    %16 = arith.mulf %6, %15 : vector<16x32xf32>
    %c0_5 = arith.constant 0 : index
    %c0_6 = arith.constant 0 : index
    %17 = vector.load %arg3[%c0_5, %c0_6] : memref<1x32xf32, #tpu.memory_space<vmem>>, vector<1x32xf32>
    %18 = vector.broadcast %17 : vector<1x32xf32> to vector<16x32xf32>
    %19 = arith.mulf %16, %18 : vector<16x32xf32>
    %c0_7 = arith.constant 0 : index
    %c0_8 = arith.constant 0 : index
    %20 = vector.load %arg4[%c0_7, %c0_8] : memref<1x32xf32, #tpu.memory_space<vmem>>, vector<1x32xf32>
    %21 = vector.broadcast %20 : vector<1x32xf32> to vector<16x32xf32>
    %22 = arith.addf %19, %21 : vector<16x32xf32>
    %23 = arith.truncf %22 : vector<16x32xf32> to vector<16x32xbf16>
    %c0_9 = arith.constant 0 : index
    %c0_10 = arith.constant 0 : index
    %24 = vector.load %arg5[%c0_9, %c0_10] : memref<32x96xbf16, #tpu.memory_space<vmem>>, vector<32x96xbf16>
    %cst_11 = arith.constant dense<0.000000e+00> : vector<16x96xf32>
    %25 = tpu.matmul %23, %24, %cst_11 {dimension_numbers = #tpu.dot_dimension_numbers<[1], [0], [0], [1], [0, 0, 1, 1], [], []>} : vector<16x32xbf16>, vector<32x96xbf16>, vector<16x96xf32> -> vector<16x96xf32>
    %c0_12 = arith.constant 0 : index
    %c0_13 = arith.constant 0 : index
    %26 = vector.load %arg6[%c0_12, %c0_13] : memref<1x96xf32, #tpu.memory_space<vmem>>, vector<1x96xf32>
    %27 = vector.broadcast %26 : vector<1x96xf32> to vector<16x96xf32>
    %28 = arith.addf %25, %27 : vector<16x96xf32>
    %c0_14 = arith.constant 0 : index
    %c0_15 = arith.constant 0 : index
    %29 = vector.load %arg7[%c0_14, %c0_15] : memref<16x96xf32, #tpu.memory_space<vmem>>, vector<16x96xf32>
    tpu.vector_store %arg7[%c0_14, %c0_15], %28 {strides = array<i32>} : memref<16x96xf32, #tpu.memory_space<vmem>>, vector<16x96xf32>,
    return
  }
  func.func @transform_0(%arg0: i32, %arg1: i32) -> (i32, i32) {
    %c0_i32 = arith.constant 0 : i32
    %c0_i32_0 = arith.constant 0 : i32
    return %arg0, %c0_i32 : i32, i32
  }
  func.func @transform_1(%arg0: i32, %arg1: i32) -> (i32, i32) {
    %c0_i32 = arith.constant 0 : i32
    %c0_i32_0 = arith.constant 0 : i32
    %c0_i32_1 = arith.constant 0 : i32
    return %c0_i32, %c0_i32_0 : i32, i32
  }
  func.func @transform_2(%arg0: i32, %arg1: i32) -> (i32, i32) {
    %c0_i32 = arith.constant 0 : i32
    %c0_i32_0 = arith.constant 0 : i32
    %c0_i32_1 = arith.constant 0 : i32
    return %c0_i32, %c0_i32_0 : i32, i32
  }
  func.func @transform_3(%arg0: i32, %arg1: i32) -> (i32, i32) {
    %c0_i32 = arith.constant 0 : i32
    %c0_i32_0 = arith.constant 0 : i32
    return %c0_i32, %arg1 : i32, i32
  }
  func.func @transform_4(%arg0: i32, %arg1: i32) -> (i32, i32) {
    %c0_i32 = arith.constant 0 : i32
    %c0_i32_0 = arith.constant 0 : i32
    return %c0_i32, %arg1 : i32, i32
  }
  func.func @transform_5(%arg0: i32, %arg1: i32) -> (i32, i32) {
    %c0_i32 = arith.constant 0 : i32
    return %arg0, %arg1 : i32, i32
  }
}

</mosaic_0001>

<llo_original>
// kernel: tpu_custom_call.1
$region0: #{tpu_custom_call.1}
  #allocation0 [shape = 'u32[]', space=smem, size = 0x4, offset = 0x4, fixed_abs, tag = 'smem constant byte address 0x4 - core index']
  #allocation1 [shape = 'u32[144,128]{1,0:T(1,128)}', space=vmem, size = 0x12000, scoped, tag = 'internal scratch']
  %s0 = inlined_call_operand.hbm [shape: f32[16,32], index: 0, kind: input, shape index: {}]
  %s1 = inlined_call_operand.vmem [shape: f32[1,32], index: 1, kind: input, shape index: {}]
  %s2 = inlined_call_operand.vmem [shape: f32[1,32], index: 2, kind: input, shape index: {}]
  %s3 = inlined_call_operand.hbm [shape: bf16[32,96], index: 3, kind: input, shape index: {}]
  %s4 = inlined_call_operand.vmem [shape: f32[1,96], index: 4, kind: input, shape index: {}]
  %s5 = inlined_call_operand.hbm [shape: f32[16,96], index: 5, kind: output, shape index: {}]
  %s6 = sld [smem:[#allocation0]]
  $region38: #{tpu_custom_call.1} parent=0
    _
  %s8 = ssub.s32 1, %s6
  %s9 = scalar_select 0, %s8, %s6
  $region1: #{tpu_custom_call.1} parent=0
    #allocation2 [shape = 'u8[8192]{0}', space=vmem, size = 0x2000, scoped, tag = 'input window, operand 0, single buffered']
    #allocation3 [shape = 's32[1]{0}', space=sflag, size = 0x4, scoped, tag = 'scoped memory for tpu_custom_call.1']
    #allocation4 [shape = 's32[1]{0}', space=sflag, size = 0x4, scoped, tag = 'scoped memory for tpu_custom_call.1']
    #allocation5 [shape = 'u8[8192]{0}', space=vmem, size = 0x2000, scoped, tag = 'input window, operand 3, single buffered']
    #allocation6 [shape = 's32[1]{0}', space=sflag, size = 0x4, scoped, tag = 'scoped memory for tpu_custom_call.1']
    #allocation7 [shape = 'u8[8192]{0}', space=vmem, size = 0x2000, scoped, tag = 'output window, operand 0, single buffered']
    %10 = vsyncpa [#allocation3], 0
    %11 = vsyncpa [#allocation6], 0
    %12 = vsyncpa [#allocation4], 0
    // Predicated region
    $region2: #{tpu_custom_call.1} parent=1 // pred_check
      _
    $region3: #{tpu_custom_call.1} parent=1 // pred_check_branch
      %14 = sbr.rel (0) target = $region5
    $region4: #{tpu_custom_call.1} parent=1 // pred_region
      %s16 = ssub.s32 256, 256
      %17 = vsyncadd [#allocation3], %s16
      %s18 = sshll.u32 [#allocation2], 4
      %s19 = int_to_ptr.vmem [resolvable:$true] %s18
      %24 = dma.hbm_to_vmem [thread:$0]  %s0, 256, %s19, [#allocation3], 128, 128, 8
    $region5: #{tpu_custom_call.1} parent=1 // pred_fallthru
      _
    // Predicated region
    $region6: #{tpu_custom_call.1} parent=1 // pred_check
      _
    $region7: #{tpu_custom_call.1} parent=1 // pred_check_branch
      %26 = sbr.rel (0) target = $region9
    $region8: #{tpu_custom_call.1} parent=1 // pred_region
      _
    $region9: #{tpu_custom_call.1} parent=1 // pred_fallthru
      _
    // Predicated region
    $region10: #{tpu_custom_call.1} parent=1 // pred_check
      _
    $region11: #{tpu_custom_call.1} parent=1 // pred_check_branch
      %28 = sbr.rel (0) target = $region13
    $region12: #{tpu_custom_call.1} parent=1 // pred_region
      _
    $region13: #{tpu_custom_call.1} parent=1 // pred_fallthru
      _
    // Predicated region
    $region14: #{tpu_custom_call.1} parent=1 // pred_check
      _
    $region15: #{tpu_custom_call.1} parent=1 // pred_check_branch
      %30 = sbr.rel (0) target = $region17
    $region16: #{tpu_custom_call.1} parent=1 // pred_region
      %s32 = ssub.s32 256, 256
      %33 = vsyncadd [#allocation6], %s32
      %s34 = sshll.u32 [#allocation5], 4
      %s35 = int_to_ptr.vmem [resolvable:$true] %s34
      %40 = dma.hbm_to_vmem [thread:$0]  %s3, 256, %s35, [#allocation6], 64, 64, 4
    $region17: #{tpu_custom_call.1} parent=1 // pred_fallthru
      _
    // Predicated region
    $region18: #{tpu_custom_call.1} parent=1 // pred_check
      _
    $region19: #{tpu_custom_call.1} parent=1 // pred_check_branch
      %42 = sbr.rel (0) target = $region21
    $region20: #{tpu_custom_call.1} parent=1 // pred_region
      _
    $region21: #{tpu_custom_call.1} parent=1 // pred_fallthru
      _
    // Predicated region
    $region22: #{tpu_custom_call.1} parent=1 // pred_check
      _
    $region23: #{tpu_custom_call.1} parent=1 // pred_check_branch
      %44 = sbr.rel (0) target = $region25
    $region24: #{tpu_custom_call.1} parent=1 // pred_region
      %45 = dma.done [#allocation3], 256
    $region25: #{tpu_custom_call.1} parent=1 // pred_fallthru
      _
    // Predicated region
    $region26: #{tpu_custom_call.1} parent=1 // pred_check
      _
    $region27: #{tpu_custom_call.1} parent=1 // pred_check_branch
      %47 = sbr.rel (0) target = $region29
    $region28: #{tpu_custom_call.1} parent=1 // pred_region
      %48 = dma.done [#allocation6], 256
    $region29: #{tpu_custom_call.1} parent=1 // pred_fallthru
      _
    %v50 = vld [vmem:[#allocation2] sm:$0xff]
    %v51 = vld [vmem:[#allocation2 + $0x8] sm:$0xff]
    %vm52 = vcmask 261120
    %v53 = vsel %vm52, %v50, 0.0
    %54 = vadd.xlane.f32.xlu0 %v53
    %v55 = vpop.xlane.xlu0 %54
    %v56 = vsel %vm52, %v51, 0.0
    %57 = vadd.xlane.f32.xlu0 %v56
    %v58 = vpop.xlane.xlu0 %57
    %v59 = vrcp.pop 32.0
    %v60 = vmul.f32 %v55, %v59
    %v61 = vmul.f32 %v58, %v59
    %v62 = vsub.f32 %v50, %v60
    %v63 = vsub.f32 %v51, %v61
    %v64 = vmul.f32 %v62, %v62
    %v65 = vmul.f32 %v63, %v63
    %v66 = vsel %vm52, %v64, 0.0
    %67 = vadd.xlane.f32.xlu0 %v66
    %v68 = vpop.xlane.xlu0 %67
    %v69 = vsel %vm52, %v65, 0.0
    %70 = vadd.xlane.f32.xlu0 %v69
    %v71 = vpop.xlane.xlu0 %70
    %v72 = vmul.f32 %v68, %v59
    %v73 = vmul.f32 %v71, %v59
    %v74 = vadd.f32 %v72, 1e-05
    %v75 = vadd.f32 %v73, 1e-05
    %v76 = vrsqrt.pop %v74
    %v77 = vrsqrt.pop %v75
    %v78 = vmul.f32 %v62, %v76
    %v79 = vmul.f32 %v63, %v77
    %v80 = vld [vmem:[%s1] sm:$0x1]
    %v82 = vlaneseq
    %v83 = vshrl.u32 %v82, 7
    %v84 = vsub.s32 0, %v83
    %v85 = vrot.slane %v80, %v84
    %v87 = vmul.f32 %v78, %v85
    %v88 = vmul.f32 %v79, %v85
    %v89 = vld [vmem:[%s2] sm:$0x1]
    %v91 = vlaneseq
    %v92 = vshrl.u32 %v91, 7
    %v93 = vsub.s32 0, %v92
    %v94 = vrot.slane %v89, %v93
    %v96 = vadd.f32 %v87, %v94
    %v97 = vadd.f32 %v88, %v94
    %v98 = vpack.c.bf16 %v97, %v96
    %v99 = vld [vmem:[#allocation5] sm:$0xf]
    %v100 = vld [vmem:[#allocation5 + $0x4] sm:$0xf]
    %v101 = vld [vmem:[#allocation5 + $0x8] sm:$0xf]
    %v102 = vld [vmem:[#allocation5 + $0xc] sm:$0xf]
    %v103 = vld [vmem:[%s4] sm:$0x1]
    %v105 = vlaneseq
    %v106 = vshrl.u32 %v105, 7
    %v107 = vsub.s32 0, %v106
    %v108 = vrot.slane %v103, %v107
    %v114 = vunpack.c.l.b16 %v99
    %v115 = vunpack.c.l.b16 %v100
    %v116 = vunpack.c.l.b16 %v101
    %v117 = vunpack.c.l.b16 %v102
    %v118 = vpack.c.b16 %v115, %v114
    %v119 = vpack.c.b16 %v117, %v116
    %v123 = vsel %vm52, %v98, 0
    %125 = vmatprep.subr.bf16.mxu0 0
    %126 = vmatpush1.bf16.msra.mxu0 %v118
    %127 = vmatprep.subr.bf16.mxu0 0
    %128 = vmatpush1.bf16.msra.mxu0 %v119
    %129 = vmatprep.subr.bf16.mxu0 0
    %130 = vmatpush1.bf16.msra.mxu0 0
    %131 = vmatprep.subr.bf16.mxu0 0
    %132 = vmatpush1.bf16.msra.mxu0 0
    %133 = vmatprep.subr.bf16.mxu0 0
    %134 = vmatpush1.bf16.msra.mxu0 0
    %135 = vmatprep.subr.bf16.mxu0 0
    %136 = vmatpush1.bf16.msra.mxu0 0
    %137 = vmatprep.subr.bf16.mxu0 0
    %138 = vmatpush1.bf16.msra.mxu0 0
    %139 = vmatprep.subr.bf16.mxu0 0
    %140 = vmatpush1.bf16.msra.mxu0 0
    %141 = vmatprep.subr.bf16.mxu0 0
    %142 = vmatpush1.bf16.msra.mxu0 0
    %143 = vmatprep.subr.bf16.mxu0 0
    %144 = vmatpush1.bf16.msra.mxu0 0
    %145 = vmatprep.subr.bf16.mxu0 0
    %146 = vmatpush1.bf16.msra.mxu0 0
    %147 = vmatprep.subr.bf16.mxu0 0
    %148 = vmatpush1.bf16.msra.mxu0 0
    %149 = vmatprep.subr.bf16.mxu0 0
    %150 = vmatpush1.bf16.msra.mxu0 0
    %151 = vmatprep.subr.bf16.mxu0 0
    %152 = vmatpush1.bf16.msra.mxu0 0
    %153 = vmatprep.subr.bf16.mxu0 0
    %154 = vmatpush1.bf16.msra.mxu0 0
    %155 = vmatprep.subr.bf16.mxu0 0
    %156 = vmatpush1.bf16.msra.mxu0 0
    %157 = vmatprep.mubr.bf16.mxu0 0
    %158 = vmatmul.mubr.bf16.gmra.mrb[0].mxu0 %v123
    %v159 = vpop.f32.mrb[0].mxu0
    %v160 = vadd.f32 %v108, %v159
    %v161 = vpop.f32.mrb[0].mxu0
    %v162 = vpop.f32.mrb[0].mxu0
    %v163 = vadd.f32 %v108, %v162
    %v164 = vpop.f32.mrb[0].mxu0
    %165 = vdwg.mxu0
    %vm166 = vcmask 785408
    %167 = vst.msk [vmem:[#allocation7] sm:$0xff] %vm166, %v160
    %168 = vst.msk [vmem:[#allocation7 + $0x8] sm:$0xff] %vm166, %v163
    // Predicated region
    $region30: #{tpu_custom_call.1} parent=1 // pred_check
      _
    $region31: #{tpu_custom_call.1} parent=1 // pred_check_branch
      %170 = sbr.rel (0) target = $region33
    $region32: #{tpu_custom_call.1} parent=1 // pred_region
      %s172 = ssub.s32 256, 256
      %173 = vsyncadd [#allocation4], %s172
      %s174 = sshll.u32 [#allocation7], 4
      %s175 = int_to_ptr.vmem [resolvable:$true] %s174
      %180 = dma.vmem_to_hbm [thread:$0]  %s175, 256, %s5, [#allocation4], 128, 128, 8
    $region33: #{tpu_custom_call.1} parent=1 // pred_fallthru
      _
    // Predicated region
    $region34: #{tpu_custom_call.1} parent=1 // pred_check
      _
    $region35: #{tpu_custom_call.1} parent=1 // pred_check_branch
      %182 = sbr.rel (0) target = $region37
    $region36: #{tpu_custom_call.1} parent=1 // pred_region
      %183 = dma.done [#allocation4], 256
    $region37: #{tpu_custom_call.1} parent=1 // pred_fallthru
      _
    %184 = vsyncpa [#allocation3], 1
    %185 = vsyncpa [#allocation6], 1
    %186 = vsyncpa [#allocation4], 1

</llo_original>
